<compile_context>
chip_gen: v7x
topology: tpu7x:2x2x1
jax: 0.10.0
libtpu: 0.0.40
codegen_flags: <defaults>
</compile_context>

<pallas_src>
import jax
import jax.numpy as jnp
from jax.experimental import pallas as pl
from jax.experimental.pallas import tpu as pltpu


_NEG = -1e30  # padded-lane fill: exp(x - m) underflows to exactly 0


def _round_up(x, m):
    return (x + m - 1) // m * m


def _cdiv(a, b):
    return -(-a // b)


def _one_hot_logits(ids, table):
    """logits[r, :] = table[ids[r], :] via a (TILE_N,K)x(K,V) MXU matmul."""
    tile_n = ids.shape[0]
    v_rows = table.shape[0]
    one_hot = (jax.lax.broadcasted_iota(jnp.int32, (tile_n, v_rows), 1)
               == ids).astype(jnp.float32)                       # (TILE_N, K)
    return jnp.dot(one_hot, table, preferred_element_type=jnp.float32)


def _bigram_logits_kernel(ids_ref, table_ref, logits_ref):
    # Inference path: embedding lookup only, one dense (TILE_N, 128) store.
    logits_ref[...] = _one_hot_logits(ids_ref[...], table_ref[...])


def _bigram_loss_kernel(ids_ref, tgt_ref, table_ref, logits_ref, rowloss_ref):
    # Training path: lookup + per-row cross-entropy from the register value.
    logits = _one_hot_logits(ids_ref[...], table_ref[...])       # (TILE_N, V_pad)
    logits_ref[...] = logits

    m = jnp.max(logits, axis=-1, keepdims=True)                  # (TILE_N, 1)
    lse = m + jnp.log(jnp.sum(jnp.exp(logits - m), axis=-1, keepdims=True))

    lane = jax.lax.broadcasted_iota(jnp.int32, logits.shape, 1)
    tgt = tgt_ref[...]                                           # (TILE_N, 1) int32
    tgt_logit = jnp.sum(jnp.where(lane == tgt, logits, 0.0),
                        axis=-1, keepdims=True)                  # (TILE_N, 1)

    rowloss_ref[...] = lse - tgt_logit                           # per-row loss


def bigram_forward(idx, table, targets=None):
    """Pallas equivalent of BigramLanguageModel.forward.

    targets is None  -> (logits of shape (B, T, V), None)
    targets provided -> (logits of shape (B*T, V),  scalar mean CE loss)
    (matches the PyTorch module, which reshapes logits on the loss path).
    """
    B, T = idx.shape
    V = table.shape[0]
    N = B * T

    v_pad = _round_up(V, 128)            # lane-dense stores + MXU-aligned K

    # Tile selection: up to 2048 rows per tile; force >= 2 grid steps when
    # there is enough work so v7x's second TensorCore participates.
    num_tiles = _cdiv(N, 2048)
    if N >= 256:
        num_tiles = max(num_tiles, 2)
    tile_n = _round_up(_cdiv(N, num_tiles), 8)
    n_pad = tile_n * num_tiles

    # Pad the table to (v_pad, v_pad): padded columns get -1e30 (drop out of
    # the row logsumexp); padded rows are never selected (token ids < V) and
    # contribute 0 * (-1e30) == 0 in the one-hot matmul.
    table_p = jnp.full((v_pad, v_pad), _NEG, dtype=jnp.float32)
    table_p = table_p.at[:V, :V].set(table.astype(jnp.float32))

    ids_col = jnp.zeros((n_pad, 1), dtype=jnp.int32)
    ids_col = ids_col.at[:N, 0].set(idx.reshape(N).astype(jnp.int32))

    grid = (num_tiles,)
    cparams = pltpu.CompilerParams(
        dimension_semantics=("parallel",),
        vmem_limit_bytes=32 * 1024 * 1024,
    )
    table_spec = pl.BlockSpec((v_pad, v_pad), lambda i: (0, 0))   # VMEM-resident
    ids_spec = pl.BlockSpec((tile_n, 1), lambda i: (i, 0))
    logits_spec = pl.BlockSpec((tile_n, v_pad), lambda i: (i, 0))

    if targets is None:
        logits_p = pl.pallas_call(
            _bigram_logits_kernel,
            out_shape=jax.ShapeDtypeStruct((n_pad, v_pad), jnp.float32),
            grid_spec=pltpu.PrefetchScalarGridSpec(
                num_scalar_prefetch=0,
                grid=grid,
                in_specs=[ids_spec, table_spec],
                out_specs=logits_spec,
            ),
            compiler_params=cparams,
        )(ids_col, table_p)
        # Slice back to the exact PyTorch shape (one fused slice+reshape copy;
        # callers tolerating 128-lane padded logits can use logits_p directly).
        logits = logits_p[:N, :V].reshape(B, T, V)
        return logits, None

    tgt_col = jnp.zeros((n_pad, 1), dtype=jnp.int32)
    tgt_col = tgt_col.at[:N, 0].set(targets.reshape(N).astype(jnp.int32))

    logits_p, row_loss = pl.pallas_call(
        _bigram_loss_kernel,
        out_shape=(
            jax.ShapeDtypeStruct((n_pad, v_pad), jnp.float32),
            jax.ShapeDtypeStruct((n_pad, 1), jnp.float32),
        ),
        grid_spec=pltpu.PrefetchScalarGridSpec(
            num_scalar_prefetch=0,
            grid=grid,
            in_specs=[ids_spec,
                      pl.BlockSpec((tile_n, 1), lambda i: (i, 0)),   # targets
                      table_spec],
            out_specs=(
                logits_spec,
                pl.BlockSpec((tile_n, 1), lambda i: (i, 0)),         # row loss
            ),
        ),
        compiler_params=cparams,
    )(ids_col, tgt_col, table_p)

    logits = logits_p[:N, :V]                       # (B*T, V), like the module
    loss = jnp.mean(row_loss[:N, 0])                # padded rows excluded
    return logits, loss


def _reference_forward(idx, table, targets):
    logits = table[idx]                             # (B, T, V)
    B, T, V = logits.shape
    lf = logits.reshape(B * T, V)
    tf = targets.reshape(B * T)
    lse = jax.scipy.special.logsumexp(lf, axis=-1)
    tgt_logit = jnp.take_along_axis(lf, tf[:, None], axis=-1)[:, 0]
    return logits, jnp.mean(lse - tgt_logit)


if __name__ == "__main__":
    key = jax.random.PRNGKey(0)
    k_tab, k_idx, k_tgt = jax.random.split(key, 3)

    vocab_size = 65      # e.g. tiny-shakespeare character vocab
    B, T = 2, 8

    # nn.Embedding default init: N(0, 1)
    table = jax.random.normal(k_tab, (vocab_size, vocab_size), dtype=jnp.float32)
    idx = jax.random.randint(k_idx, (B, T), 0, vocab_size, dtype=jnp.int32)
    targets = jax.random.randint(k_tgt, (B, T), 0, vocab_size, dtype=jnp.int32)

    ref_logits, ref_loss = _reference_forward(idx, table, targets)

    # Training path: logits come back flattened to (B*T, V), like the module.
    logits_flat, loss = bigram_forward(idx, table, targets)
    logits_flat = jax.block_until_ready(logits_flat)
    loss = jax.block_until_ready(loss)
    assert logits_flat.shape == (B * T, vocab_size)
    assert jnp.allclose(logits_flat, ref_logits.reshape(B * T, vocab_size), atol=1e-5)
    assert jnp.allclose(loss, ref_loss, atol=1e-5)

    # Inference path (targets=None): logits stay (B, T, V), loss is None.
    logits_only, none_loss = bigram_forward(idx, table, None)
    logits_only = jax.block_until_ready(logits_only)
    assert none_loss is None
    assert logits_only.shape == (B, T, vocab_size)
    assert jnp.allclose(logits_only, ref_logits, atol=1e-5)

    print("KERNEL_OK")
</pallas_src>

<mosaic_0001>
module attributes {stable_mosaic.version = 11 : i64} {
  func.func @_bigram_loss_kernel(%arg0: i32, %arg1: memref<16x1xi32, #tpu.memory_space<vmem>>, %arg2: memref<16x1xi32, #tpu.memory_space<vmem>>, %arg3: memref<128x128xf32, #tpu.memory_space<vmem>>, %arg4: memref<16x128xf32, #tpu.memory_space<vmem>>, %arg5: memref<16x1xf32, #tpu.memory_space<vmem>>) attributes {dimension_semantics = [#tpu.dimension_semantics<parallel>], iteration_bounds = array<i64: 1>, scalar_prefetch = 0 : i64, scratch_operands = 0 : i64, tpu.core_type = #tpu.core_type<tc>, window_params = [{transform_indices = @transform_0, window_bounds = array<i64: 16, 1>}, {transform_indices = @transform_1, window_bounds = array<i64: 16, 1>}, {pipeline_mode = #tpu.pipeline_mode<synchronous>, transform_indices = @transform_2, window_bounds = array<i64: 128, 128>}, {transform_indices = @transform_3, window_bounds = array<i64: 16, 128>}, {transform_indices = @transform_4, window_bounds = array<i64: 16, 1>}]} {
    %c0 = arith.constant 0 : index
    %c0_0 = arith.constant 0 : index
    %0 = vector.load %arg1[%c0, %c0_0] : memref<16x1xi32, #tpu.memory_space<vmem>>, vector<16x1xi32>
    %c0_1 = arith.constant 0 : index
    %c0_2 = arith.constant 0 : index
    %1 = vector.load %arg3[%c0_1, %c0_2] : memref<128x128xf32, #tpu.memory_space<vmem>>, vector<128x128xf32>
    %2 = tpu.iota {dimensions = array<i32: 1>} : vector<16x128xi32>
    %3 = vector.broadcast %0 : vector<16x1xi32> to vector<16x128xi32>
    %4 = arith.cmpi eq, %2, %3 : vector<16x128xi32>
    %5 = arith.extui %4 : vector<16x128xi1> to vector<16x128xi32>
    %6 = arith.sitofp %5 : vector<16x128xi32> to vector<16x128xf32>
    %cst = arith.constant dense<0.000000e+00> : vector<16x128xf32>
    %7 = tpu.matmul %6, %1, %cst {dimension_numbers = #tpu.dot_dimension_numbers<[1], [0], [0], [1], [0, 0, 1, 1], [], []>} : vector<16x128xf32>, vector<128x128xf32>, vector<16x128xf32> -> vector<16x128xf32>
    %c0_3 = arith.constant 0 : index
    %c0_4 = arith.constant 0 : index
    %8 = vector.load %arg4[%c0_3, %c0_4] : memref<16x128xf32, #tpu.memory_space<vmem>>, vector<16x128xf32>
    tpu.vector_store %arg4[%c0_3, %c0_4], %7 {strides = array<i32>} : memref<16x128xf32, #tpu.memory_space<vmem>>, vector<16x128xf32>,
    %cst_5 = arith.constant dense<0xFF800000> : vector<16xf32>
    %9 = vector.multi_reduction <maximumf>, %7, %cst_5 [1] : vector<16x128xf32> to vector<16xf32>
    %10 = vector.shape_cast %9 : vector<16xf32> to vector<16x1xf32>
    %11 = vector.broadcast %10 : vector<16x1xf32> to vector<16x128xf32>
    %12 = arith.subf %7, %11 : vector<16x128xf32>
    %13 = math.exp %12 : vector<16x128xf32>
    %cst_6 = arith.constant dense<0.000000e+00> : vector<16xf32>
    %14 = vector.multi_reduction <add>, %13, %cst_6 [1] : vector<16x128xf32> to vector<16xf32>
    %15 = vector.shape_cast %14 : vector<16xf32> to vector<16x1xf32>
    %16 = math.log %15 : vector<16x1xf32>
    %17 = arith.addf %10, %16 : vector<16x1xf32>
    %18 = tpu.iota {dimensions = array<i32: 1>} : vector<16x128xi32>
    %c0_7 = arith.constant 0 : index
    %c0_8 = arith.constant 0 : index
    %19 = vector.load %arg2[%c0_7, %c0_8] : memref<16x1xi32, #tpu.memory_space<vmem>>, vector<16x1xi32>
    %20 = vector.broadcast %19 : vector<16x1xi32> to vector<16x128xi32>
    %21 = arith.cmpi eq, %18, %20 : vector<16x128xi32>
    %cst_9 = arith.constant 0.000000e+00 : f32
    %22 = vector.broadcast %cst_9 : f32 to vector<16x128xf32>
    %23 = arith.select %21, %7, %22 : vector<16x128xi1>, vector<16x128xf32>
    %cst_10 = arith.constant dense<0.000000e+00> : vector<16xf32>
    %24 = vector.multi_reduction <add>, %23, %cst_10 [1] : vector<16x128xf32> to vector<16xf32>
    %25 = vector.shape_cast %24 : vector<16xf32> to vector<16x1xf32>
    %26 = arith.subf %17, %25 : vector<16x1xf32>
    %c0_11 = arith.constant 0 : index
    %c0_12 = arith.constant 0 : index
    %27 = vector.load %arg5[%c0_11, %c0_12] : memref<16x1xf32, #tpu.memory_space<vmem>>, vector<16x1xf32>
    tpu.vector_store %arg5[%c0_11, %c0_12], %26 {strides = array<i32>} : memref<16x1xf32, #tpu.memory_space<vmem>>, vector<16x1xf32>,
    return
  }
  func.func @transform_0(%arg0: i32) -> (i32, i32) {
    %c0_i32 = arith.constant 0 : i32
    %c0_i32_0 = arith.constant 0 : i32
    return %arg0, %c0_i32 : i32, i32
  }
  func.func @transform_1(%arg0: i32) -> (i32, i32) {
    %c0_i32 = arith.constant 0 : i32
    %c0_i32_0 = arith.constant 0 : i32
    return %arg0, %c0_i32 : i32, i32
  }
  func.func @transform_2(%arg0: i32) -> (i32, i32) {
    %c0_i32 = arith.constant 0 : i32
    %c0_i32_0 = arith.constant 0 : i32
    %c0_i32_1 = arith.constant 0 : i32
    return %c0_i32, %c0_i32_0 : i32, i32
  }
  func.func @transform_3(%arg0: i32) -> (i32, i32) {
    %c0_i32 = arith.constant 0 : i32
    %c0_i32_0 = arith.constant 0 : i32
    return %arg0, %c0_i32 : i32, i32
  }
  func.func @transform_4(%arg0: i32) -> (i32, i32) {
    %c0_i32 = arith.constant 0 : i32
    %c0_i32_0 = arith.constant 0 : i32
    return %arg0, %c0_i32 : i32, i32
  }
}

</mosaic_0001>

<llo_original>
// kernel: tpu_custom_call.1
$region0: #{tpu_custom_call.1}
  #allocation0 [shape = 'u32[]', space=smem, size = 0x4, offset = 0x4, fixed_abs, tag = 'smem constant byte address 0x4 - core index']
  #allocation1 [shape = 'u32[144,128]{1,0:T(1,128)}', space=vmem, size = 0x12000, scoped, tag = 'internal scratch']
  %s0 = inlined_call_operand.vmem [shape: s32[16,1], index: 0, kind: input, shape index: {}]
  %s1 = inlined_call_operand.vmem [shape: s32[16,1], index: 1, kind: input, shape index: {}]
  %s2 = inlined_call_operand.hbm [shape: f32[128,128], index: 2, kind: input, shape index: {}]
  %s3 = inlined_call_operand.hbm [shape: f32[16,128], index: 3, kind: output, shape index: {0}]
  %s4 = inlined_call_operand.vmem [shape: f32[16,1], index: 4, kind: output, shape index: {1}]
  %5 = xla_tuple %s3, %s4
  %s6 = sld [smem:[#allocation0]]
  $region34: #{tpu_custom_call.1} parent=0
    _
  %s8 = ssub.s32 1, %s6
  %s9 = scalar_select 0, %s8, %s6
  $region1: #{tpu_custom_call.1} parent=0
    #allocation2 [shape = 'u8[65536]{0}', space=vmem, size = 0x10000, scoped, tag = 'input window, operand 2, single buffered']
    #allocation3 [shape = 's32[1]{0}', space=sflag, size = 0x4, scoped, tag = 'scoped memory for tpu_custom_call.1']
    #allocation4 [shape = 's32[1]{0}', space=sflag, size = 0x4, scoped, tag = 'scoped memory for tpu_custom_call.1']
    #allocation5 [shape = 'u8[8192]{0}', space=vmem, size = 0x2000, scoped, tag = 'output window, operand 0, single buffered']
    %10 = vsyncpa [#allocation3], 0
    %11 = vsyncpa [#allocation4], 0
    // Predicated region
    $region2: #{tpu_custom_call.1} parent=1 // pred_check
      _
    $region3: #{tpu_custom_call.1} parent=1 // pred_check_branch
      %13 = sbr.rel (0) target = $region5
    $region4: #{tpu_custom_call.1} parent=1 // pred_region
      _
    $region5: #{tpu_custom_call.1} parent=1 // pred_fallthru
      _
    // Predicated region
    $region6: #{tpu_custom_call.1} parent=1 // pred_check
      _
    $region7: #{tpu_custom_call.1} parent=1 // pred_check_branch
      %15 = sbr.rel (0) target = $region9
    $region8: #{tpu_custom_call.1} parent=1 // pred_region
      _
    $region9: #{tpu_custom_call.1} parent=1 // pred_fallthru
      _
    // Predicated region
    $region10: #{tpu_custom_call.1} parent=1 // pred_check
      _
    $region11: #{tpu_custom_call.1} parent=1 // pred_check_branch
      %17 = sbr.rel (0) target = $region13
    $region12: #{tpu_custom_call.1} parent=1 // pred_region
      %s19 = ssub.s32 2048, 2048
      %20 = vsyncadd [#allocation3], %s19
      %s21 = sshll.u32 [#allocation2], 4
      %s22 = int_to_ptr.vmem [resolvable:$true] %s21
      %27 = dma.hbm_to_vmem [thread:$0]  %s2, 2048, %s22, [#allocation3], 128, 128, 8
    $region13: #{tpu_custom_call.1} parent=1 // pred_fallthru
      _
    // Predicated region
    $region14: #{tpu_custom_call.1} parent=1 // pred_check
      _
    $region15: #{tpu_custom_call.1} parent=1 // pred_check_branch
      %29 = sbr.rel (0) target = $region17
    $region16: #{tpu_custom_call.1} parent=1 // pred_region
      %30 = dma.done [#allocation3], 2048
    $region17: #{tpu_custom_call.1} parent=1 // pred_fallthru
      _
    %v31 = vld [vmem:[%s0] sm:$0xff]
    %v32 = vld [vmem:[%s0 + $0x8] sm:$0xff]
    %v33 = vld [vmem:[#allocation2] sm:$0xff]
    %v34 = vld [vmem:[#allocation2 + $0x8] sm:$0xff]
    %v35 = vld [vmem:[#allocation2 + $0x10] sm:$0xff]
    %v36 = vld [vmem:[#allocation2 + $0x18] sm:$0xff]
    %v37 = vld [vmem:[#allocation2 + $0x20] sm:$0xff]
    %v38 = vld [vmem:[#allocation2 + $0x28] sm:$0xff]
    %v39 = vld [vmem:[#allocation2 + $0x30] sm:$0xff]
    %v40 = vld [vmem:[#allocation2 + $0x38] sm:$0xff]
    %v41 = vld [vmem:[#allocation2 + $0x40] sm:$0xff]
    %v42 = vld [vmem:[#allocation2 + $0x48] sm:$0xff]
    %v43 = vld [vmem:[#allocation2 + $0x50] sm:$0xff]
    %v44 = vld [vmem:[#allocation2 + $0x58] sm:$0xff]
    %v45 = vld [vmem:[#allocation2 + $0x60] sm:$0xff]
    %v46 = vld [vmem:[#allocation2 + $0x68] sm:$0xff]
    %v47 = vld [vmem:[#allocation2 + $0x70] sm:$0xff]
    %v48 = vld [vmem:[#allocation2 + $0x78] sm:$0xff]
    %v49 = vlaneseq
    %v50 = vand.u32 %v49, 127
    %51 = vset.pattern.permute.xlu0 0
    %52 = vperm.xlu0 %51, %v31
    %v53 = vpop.permute.xlu0 %52
    %54 = vset.pattern.permute.xlu0 0
    %55 = vperm.xlu0 %54, %v32
    %v56 = vpop.permute.xlu0 %55
    %vm57 = vcmp.eq.s32.totalorder %v50, %v53
    %vm58 = vcmp.eq.s32.totalorder %v50, %v56
    %v59 = vsel %vm57, 1, 0
    %v60 = vsel %vm58, 1, 0
    %v61 = vcvt.s32.f32 %v59
    %v62 = vcvt.s32.f32 %v60
    %63 = vmatprep.subr.mxu0 0.0
    %64 = vmatpush1.msra.mxu0 %v33
    %65 = vmatprep.subr.mxu0 0.0
    %66 = vmatpush1.msra.mxu0 %v34
    %67 = vmatprep.subr.mxu0 0.0
    %68 = vmatpush1.msra.mxu0 %v35
    %69 = vmatprep.subr.mxu0 0.0
    %70 = vmatpush1.msra.mxu0 %v36
    %71 = vmatprep.subr.mxu0 0.0
    %72 = vmatpush1.msra.mxu0 %v37
    %73 = vmatprep.subr.mxu0 0.0
    %74 = vmatpush1.msra.mxu0 %v38
    %75 = vmatprep.subr.mxu0 0.0
    %76 = vmatpush1.msra.mxu0 %v39
    %77 = vmatprep.subr.mxu0 0.0
    %78 = vmatpush1.msra.mxu0 %v40
    %79 = vmatprep.subr.mxu0 0.0
    %80 = vmatpush1.msra.mxu0 %v41
    %81 = vmatprep.subr.mxu0 0.0
    %82 = vmatpush1.msra.mxu0 %v42
    %83 = vmatprep.subr.mxu0 0.0
    %84 = vmatpush1.msra.mxu0 %v43
    %85 = vmatprep.subr.mxu0 0.0
    %86 = vmatpush1.msra.mxu0 %v44
    %87 = vmatprep.subr.mxu0 0.0
    %88 = vmatpush1.msra.mxu0 %v45
    %89 = vmatprep.subr.mxu0 0.0
    %90 = vmatpush1.msra.mxu0 %v46
    %91 = vmatprep.subr.mxu0 0.0
    %92 = vmatpush1.msra.mxu0 %v47
    %93 = vmatprep.subr.mxu0 0.0
    %94 = vmatpush1.msra.mxu0 %v48
    %95 = vmatprep.subr.mxu0 0.0
    %96 = vmatpush1.msra.mxu0 0.0
    %97 = vmatprep.subr.mxu0 0.0
    %98 = vmatpush1.msra.mxu0 0.0
    %99 = vmatprep.subr.mxu0 0.0
    %100 = vmatpush1.msra.mxu0 0.0
    %101 = vmatprep.subr.mxu0 0.0
    %102 = vmatpush1.msra.mxu0 0.0
    %103 = vmatprep.subr.mxu0 0.0
    %104 = vmatpush1.msra.mxu0 0.0
    %105 = vmatprep.subr.mxu0 0.0
    %106 = vmatpush1.msra.mxu0 0.0
    %107 = vmatprep.subr.mxu0 0.0
    %108 = vmatpush1.msra.mxu0 0.0
    %109 = vmatprep.subr.mxu0 0.0
    %110 = vmatpush1.msra.mxu0 0.0
    %111 = vmatprep.subr.mxu0 0.0
    %112 = vmatpush1.msra.mxu0 0.0
    %113 = vmatprep.subr.mxu0 0.0
    %114 = vmatpush1.msra.mxu0 0.0
    %115 = vmatprep.subr.mxu0 0.0
    %116 = vmatpush1.msra.mxu0 0.0
    %117 = vmatprep.subr.mxu0 0.0
    %118 = vmatpush1.msra.mxu0 0.0
    %119 = vmatprep.subr.mxu0 0.0
    %120 = vmatpush1.msra.mxu0 0.0
    %121 = vmatprep.subr.mxu0 0.0
    %122 = vmatpush1.msra.mxu0 0.0
    %123 = vmatprep.subr.mxu0 0.0
    %124 = vmatpush1.msra.mxu0 0.0
    %125 = vmatprep.subr.mxu0 0.0
    %126 = vmatpush1.msra.mxu0 0.0
    %127 = vmatprep.mubr.f32.mxu0 0.0
    %128 = vmatmul.mubr.f32.gmra.mrb[0].mxu0 %v61
    %v129 = vpop.f32.mrb[0].mxu0
    %v130 = vadd.f32 0.0, %v129
    %v131 = vpop.f32.mrb[0].mxu0
    %132 = vmatprep.mubr.f32.mxu0 0.0
    %133 = vmatmul.mubr.f32.gmra.mrb[0].mxu0 %v62
    %v134 = vpop.f32.mrb[0].mxu0
    %v135 = vadd.f32 0.0, %v134
    %v136 = vpop.f32.mrb[0].mxu0
    %137 = vdwg.mxu0
    %138 = vst [vmem:[#allocation5] sm:$0xff] %v130
    %139 = vst [vmem:[#allocation5 + $0x8] sm:$0xff] %v135
    %140 = vmax.xlane.f32.xlu0 %v130
    %v141 = vpop.xlane.xlu0 %140
    %142 = vmax.xlane.f32.xlu0 %v135
    %v143 = vpop.xlane.xlu0 %142
    %v144 = vsub.f32 %v130, %v141
    %v145 = vsub.f32 %v135, %v143
    %v146 = vmul.f32 %v144, 1.442695
    %v147 = vpow.pop %v146
    %v148 = vmul.f32 %v145, 1.442695
    %v149 = vpow.pop %v148
    %150 = vadd.xlane.f32.xlu0 %v147
    %v151 = vpop.xlane.xlu0 %150
    %152 = vadd.xlane.f32.xlu0 %v149
    %v153 = vpop.xlane.xlu0 %152
    %v154 = vlog2.pop %v151
    %v155 = vmul.f32 %v154, 0.6931472
    %v156 = vlog2.pop %v153
    %v157 = vmul.f32 %v156, 0.6931472
    %v158 = vadd.f32 %v141, %v155
    %v159 = vadd.f32 %v143, %v157
    %v160 = vld [vmem:[%s1] sm:$0xff]
    %v161 = vld [vmem:[%s1 + $0x8] sm:$0xff]
    %162 = vset.pattern.permute.xlu0 0
    %163 = vperm.xlu0 %162, %v160
    %v164 = vpop.permute.xlu0 %163
    %165 = vset.pattern.permute.xlu0 0
    %166 = vperm.xlu0 %165, %v161
    %v167 = vpop.permute.xlu0 %166
    %vm168 = vcmp.eq.s32.totalorder %v50, %v164
    %vm169 = vcmp.eq.s32.totalorder %v50, %v167
    %v170 = vsel %vm168, %v130, 0.0
    %v171 = vsel %vm169, %v135, 0.0
    %172 = vadd.xlane.f32.xlu0 %v170
    %v173 = vpop.xlane.xlu0 %172
    %174 = vadd.xlane.f32.xlu0 %v171
    %v175 = vpop.xlane.xlu0 %174
    %v176 = vsub.f32 %v158, %v173
    %v177 = vsub.f32 %v159, %v175
    %vm178 = vcmask 7168
    %179 = vst.msk [vmem:[%s4] sm:$0xff] %vm178, %v176
    %180 = vst.msk [vmem:[%s4 + $0x8] sm:$0xff] %vm178, %v177
    // Predicated region
    $region18: #{tpu_custom_call.1} parent=1 // pred_check
      _
    $region19: #{tpu_custom_call.1} parent=1 // pred_check_branch
      %182 = sbr.rel (0) target = $region21
    $region20: #{tpu_custom_call.1} parent=1 // pred_region
      %s184 = ssub.s32 256, 256
      %185 = vsyncadd [#allocation4], %s184
      %s186 = sshll.u32 [#allocation5], 4
      %s187 = int_to_ptr.vmem [resolvable:$true] %s186
      %192 = dma.vmem_to_hbm [thread:$0]  %s187, 256, %s3, [#allocation4], 128, 128, 8
    $region21: #{tpu_custom_call.1} parent=1 // pred_fallthru
      _
    // Predicated region
    $region22: #{tpu_custom_call.1} parent=1 // pred_check
      _
    $region23: #{tpu_custom_call.1} parent=1 // pred_check_branch
      %194 = sbr.rel (0) target = $region25
    $region24: #{tpu_custom_call.1} parent=1 // pred_region
      _
    $region25: #{tpu_custom_call.1} parent=1 // pred_fallthru
      _
    // Predicated region
    $region26: #{tpu_custom_call.1} parent=1 // pred_check
      _
    $region27: #{tpu_custom_call.1} parent=1 // pred_check_branch
      %196 = sbr.rel (0) target = $region29
    $region28: #{tpu_custom_call.1} parent=1 // pred_region
      %197 = dma.done [#allocation4], 256
    $region29: #{tpu_custom_call.1} parent=1 // pred_fallthru
      _
    // Predicated region
    $region30: #{tpu_custom_call.1} parent=1 // pred_check
      _
    $region31: #{tpu_custom_call.1} parent=1 // pred_check_branch
      %199 = sbr.rel (0) target = $region33
    $region32: #{tpu_custom_call.1} parent=1 // pred_region
      _
    $region33: #{tpu_custom_call.1} parent=1 // pred_fallthru
      _
    %200 = vsyncpa [#allocation3], 1
    %201 = vsyncpa [#allocation4], 1

</llo_original>
